<compile_context>
chip_gen: v7x
topology: tpu7x:2x2x1
jax: 0.10.0
libtpu: 0.0.40
codegen_flags: <defaults>
</compile_context>

<pallas_src>
import jax
import jax.numpy as jnp
import numpy as np
from jax.experimental import pallas as pl
from jax.experimental.pallas import tpu as pltpu


def _odefunc_kernel(adj_ref, wt_ref, x_ref, x0_ref, o_ref):
    # adj_ref : (B*N, B*N)  block-diag kron(I_B, alpha/2 * adj)
    # wt_ref  : (TF, TF)    kron(I_T, w_eff) + kron(w2_eff, I_F) - 3*I_TF
    # x_ref   : (B*N, TF)
    # x0_ref  : (B*N, TF)
    x = x_ref[...]
    xa = jnp.dot(adj_ref[...], x, preferred_element_type=jnp.float32)
    xw = jnp.dot(x, wt_ref[...], preferred_element_type=jnp.float32)
    o_ref[...] = (xa + xw + x0_ref[...]).astype(o_ref.dtype)


def odefunc_forward(x, x0, adj, alpha_param, nodes, w, d, w2, d2):
    """Pallas implementation of ODEFunc_.forward(t, x)."""
    B, N, T, F = x.shape
    TF = T * F
    BN = B * N

    # ---- plain-JAX glue: parameter transforms (tiny, O(param^2)) ----
    # alpha/2 folded into the adjacency (per output row of the adj matmul).
    alpha_half = jax.nn.sigmoid(alpha_param[nodes]).astype(jnp.float32) * 0.5  # (N,)
    adj_scaled = alpha_half[:, None] * adj.astype(jnp.float32)                 # (N, N)
    # Fold batch into the node axis via a block-diagonal adjacency.
    adj_block = jnp.kron(jnp.eye(B, dtype=jnp.float32), adj_scaled)            # (BN, BN)

    d_c = jnp.clip(d, 0.0, 1.0)
    w_eff = jnp.matmul(w * d_c, w.T).astype(jnp.float32)                       # (F, F)
    d2_c = jnp.clip(d2, 0.0, 1.0)
    w2_eff = jnp.matmul(w2 * d2_c, w2.T).astype(jnp.float32)                   # (T, T)

    # Flattened (t*F + f) ordering matches x.reshape(BN, TF) row-major:
    #   xw  : out[t*F+m] = sum_f x[t*F+f] w_eff[f,m]   -> kron(I_T, w_eff)
    #   xw2 : out[m*F+f] = sum_t x[t*F+f] w2_eff[t,m]  -> kron(w2_eff, I_F)
    #   -3x :                                          -> -3 * I_TF
    w_total = (jnp.kron(jnp.eye(T, dtype=jnp.float32), w_eff)
               + jnp.kron(w2_eff, jnp.eye(F, dtype=jnp.float32))
               - 3.0 * jnp.eye(TF, dtype=jnp.float32))                         # (TF, TF)

    # ---- lane-dense flattening: (B, N, T, F) -> (B*N, T*F) ----
    x_flat = x.reshape(BN, TF)
    x0_flat = x0.reshape(BN, TF)

    out_flat = pl.pallas_call(
        _odefunc_kernel,
        out_shape=jax.ShapeDtypeStruct((BN, TF), x.dtype),
        grid=(1,),
        in_specs=[
            pl.BlockSpec((BN, BN), lambda i: (0, 0)),   # block-diag scaled adj
            pl.BlockSpec((TF, TF), lambda i: (0, 0)),   # fused weight
            pl.BlockSpec((BN, TF), lambda i: (0, 0)),   # x
            pl.BlockSpec((BN, TF), lambda i: (0, 0)),   # x0
        ],
        out_specs=pl.BlockSpec((BN, TF), lambda i: (0, 0)),
        compiler_params=pltpu.CompilerParams(
            dimension_semantics=("arbitrary",)),
    )(adj_block, w_total, x_flat, x0_flat)

    return out_flat.reshape(B, N, T, F)


def odefunc_reference(x, x0, adj, alpha_param, nodes, w, d, w2, d2):
    """Pure-JAX transcription of the PyTorch forward, for verification."""
    alpha = jax.nn.sigmoid(alpha_param[nodes])[None, :, None, None]
    xa = jnp.einsum('ij,kjlm->kilm', adj, x)
    d_c = jnp.clip(d, 0.0, 1.0)
    w_eff = jnp.matmul(w * d_c, w.T)
    xw = jnp.einsum('ijkl,lm->ijkm', x, w_eff)
    d2_c = jnp.clip(d2, 0.0, 1.0)
    w2_eff = jnp.matmul(w2 * d2_c, w2.T)
    xw2 = jnp.einsum('ijkl,km->ijml', x, w2_eff)
    return alpha / 2 * xa - x + xw - x + xw2 - x + x0


if __name__ == "__main__":
    # Small, module-consistent shapes.  T*F = 8*16 = 128 -> lane-dense output.
    B = 2            # batch
    node_num = 10    # total nodes (alpha parameter length)
    T = 8            # temporal_dim
    F = 16           # feature_dim
    nodes = jnp.array([0, 2, 3, 4, 5, 6, 7, 9], dtype=jnp.int32)
    N = int(nodes.shape[0])   # selected nodes; adj is (N, N)

    key = jax.random.PRNGKey(0)
    k1, k2, k3, k4, k5, k6, k7, k8 = jax.random.split(key, 8)

    # Inputs / state set externally in the PyTorch module (x, x0, adj).
    x = jax.random.normal(k1, (B, N, T, F), dtype=jnp.float32)
    x0 = jax.random.normal(k2, (B, N, T, F), dtype=jnp.float32)
    adj = jax.random.uniform(k3, (N, N), dtype=jnp.float32)

    # Parameters: __init__ values plus small deterministic perturbations so
    # every compute path (clamp, w*d@w.T, etc.) is exercised numerically.
    alpha_param = 0.8 * jnp.ones((node_num,), jnp.float32) \
        + 0.1 * jax.random.normal(k4, (node_num,), dtype=jnp.float32)
    w = jnp.eye(F, dtype=jnp.float32) \
        + 0.05 * jax.random.normal(k5, (F, F), dtype=jnp.float32)
    d = jax.random.uniform(k6, (F,), dtype=jnp.float32, minval=-0.25, maxval=1.25)
    w2 = jnp.eye(T, dtype=jnp.float32) \
        + 0.05 * jax.random.normal(k7, (T, T), dtype=jnp.float32)
    d2 = jax.random.uniform(k8, (T,), dtype=jnp.float32, minval=-0.25, maxval=1.25)

    out = odefunc_forward(x, x0, adj, alpha_param, nodes, w, d, w2, d2)
    out = jax.block_until_ready(out)

    ref = odefunc_reference(x, x0, adj, alpha_param, nodes, w, d, w2, d2)
    np.testing.assert_allclose(np.asarray(out), np.asarray(ref),
                               rtol=1e-5, atol=1e-5)
    print("KERNEL_OK")
</pallas_src>

<mosaic_0001>
module attributes {stable_mosaic.version = 11 : i64} {
  func.func @_odefunc_kernel(%arg0: i32, %arg1: memref<16x16xf32, #tpu.memory_space<vmem>>, %arg2: memref<128x128xf32, #tpu.memory_space<vmem>>, %arg3: memref<16x128xf32, #tpu.memory_space<vmem>>, %arg4: memref<16x128xf32, #tpu.memory_space<vmem>>, %arg5: memref<16x128xf32, #tpu.memory_space<vmem>>) attributes {dimension_semantics = [#tpu.dimension_semantics<arbitrary>], iteration_bounds = array<i64: 1>, scalar_prefetch = 0 : i64, scratch_operands = 0 : i64, tpu.core_type = #tpu.core_type<tc>, window_params = [{pipeline_mode = #tpu.pipeline_mode<synchronous>, transform_indices = @transform_0, window_bounds = array<i64: 16, 16>}, {pipeline_mode = #tpu.pipeline_mode<synchronous>, transform_indices = @transform_1, window_bounds = array<i64: 128, 128>}, {pipeline_mode = #tpu.pipeline_mode<synchronous>, transform_indices = @transform_2, window_bounds = array<i64: 16, 128>}, {pipeline_mode = #tpu.pipeline_mode<synchronous>, transform_indices = @transform_3, window_bounds = array<i64: 16, 128>}, {pipeline_mode = #tpu.pipeline_mode<synchronous>, transform_indices = @transform_4, window_bounds = array<i64: 16, 128>}]} {
    %c0 = arith.constant 0 : index
    %c0_0 = arith.constant 0 : index
    %0 = vector.load %arg3[%c0, %c0_0] : memref<16x128xf32, #tpu.memory_space<vmem>>, vector<16x128xf32>
    %c0_1 = arith.constant 0 : index
    %c0_2 = arith.constant 0 : index
    %1 = vector.load %arg1[%c0_1, %c0_2] : memref<16x16xf32, #tpu.memory_space<vmem>>, vector<16x16xf32>
    %cst = arith.constant dense<0.000000e+00> : vector<16x128xf32>
    %2 = tpu.matmul %1, %0, %cst {dimension_numbers = #tpu.dot_dimension_numbers<[1], [0], [0], [1], [0, 0, 1, 1], [], []>} : vector<16x16xf32>, vector<16x128xf32>, vector<16x128xf32> -> vector<16x128xf32>
    %c0_3 = arith.constant 0 : index
    %c0_4 = arith.constant 0 : index
    %3 = vector.load %arg2[%c0_3, %c0_4] : memref<128x128xf32, #tpu.memory_space<vmem>>, vector<128x128xf32>
    %cst_5 = arith.constant dense<0.000000e+00> : vector<16x128xf32>
    %4 = tpu.matmul %0, %3, %cst_5 {dimension_numbers = #tpu.dot_dimension_numbers<[1], [0], [0], [1], [0, 0, 1, 1], [], []>} : vector<16x128xf32>, vector<128x128xf32>, vector<16x128xf32> -> vector<16x128xf32>
    %5 = arith.addf %2, %4 : vector<16x128xf32>
    %c0_6 = arith.constant 0 : index
    %c0_7 = arith.constant 0 : index
    %6 = vector.load %arg4[%c0_6, %c0_7] : memref<16x128xf32, #tpu.memory_space<vmem>>, vector<16x128xf32>
    %7 = arith.addf %5, %6 : vector<16x128xf32>
    %c0_8 = arith.constant 0 : index
    %c0_9 = arith.constant 0 : index
    %8 = vector.load %arg5[%c0_8, %c0_9] : memref<16x128xf32, #tpu.memory_space<vmem>>, vector<16x128xf32>
    tpu.vector_store %arg5[%c0_8, %c0_9], %7 {strides = array<i32>} : memref<16x128xf32, #tpu.memory_space<vmem>>, vector<16x128xf32>,
    return
  }
  func.func @transform_0(%arg0: i32) -> (i32, i32) {
    %c0_i32 = arith.constant 0 : i32
    %c0_i32_0 = arith.constant 0 : i32
    %c0_i32_1 = arith.constant 0 : i32
    return %c0_i32, %c0_i32_0 : i32, i32
  }
  func.func @transform_1(%arg0: i32) -> (i32, i32) {
    %c0_i32 = arith.constant 0 : i32
    %c0_i32_0 = arith.constant 0 : i32
    %c0_i32_1 = arith.constant 0 : i32
    return %c0_i32, %c0_i32_0 : i32, i32
  }
  func.func @transform_2(%arg0: i32) -> (i32, i32) {
    %c0_i32 = arith.constant 0 : i32
    %c0_i32_0 = arith.constant 0 : i32
    %c0_i32_1 = arith.constant 0 : i32
    return %c0_i32, %c0_i32_0 : i32, i32
  }
  func.func @transform_3(%arg0: i32) -> (i32, i32) {
    %c0_i32 = arith.constant 0 : i32
    %c0_i32_0 = arith.constant 0 : i32
    %c0_i32_1 = arith.constant 0 : i32
    return %c0_i32, %c0_i32_0 : i32, i32
  }
  func.func @transform_4(%arg0: i32) -> (i32, i32) {
    %c0_i32 = arith.constant 0 : i32
    %c0_i32_0 = arith.constant 0 : i32
    %c0_i32_1 = arith.constant 0 : i32
    return %c0_i32, %c0_i32_0 : i32, i32
  }
}

</mosaic_0001>

<llo_original>
// kernel: tpu_custom_call.1
$region0: #{tpu_custom_call.1}
  #allocation0 [shape = 'u32[]', space=smem, size = 0x4, offset = 0x4, fixed_abs, tag = 'smem constant byte address 0x4 - core index']
  #allocation1 [shape = 'u32[144,128]{1,0:T(1,128)}', space=vmem, size = 0x12000, scoped, tag = 'internal scratch']
  %s0 = inlined_call_operand.hbm [shape: f32[16,16], index: 0, kind: input, shape index: {}]
  %s1 = inlined_call_operand.hbm [shape: f32[128,128], index: 1, kind: input, shape index: {}]
  %s2 = inlined_call_operand.hbm [shape: f32[16,128], index: 2, kind: input, shape index: {}]
  %s3 = inlined_call_operand.hbm [shape: f32[16,128], index: 3, kind: input, shape index: {}]
  %s4 = inlined_call_operand.hbm [shape: f32[16,128], index: 4, kind: output, shape index: {}]
  %s5 = sld [smem:[#allocation0]]
  $region42: #{tpu_custom_call.1} parent=0
    _
  %s7 = ssub.s32 1, %s5
  %s8 = scalar_select 0, %s7, %s5
  $region1: #{tpu_custom_call.1} parent=0
    #allocation2 [shape = 'u8[8192]{0}', space=vmem, size = 0x2000, scoped, tag = 'input window, operand 0, single buffered']
    #allocation3 [shape = 's32[1]{0}', space=sflag, size = 0x4, scoped, tag = 'scoped memory for tpu_custom_call.1']
    #allocation4 [shape = 's32[1]{0}', space=sflag, size = 0x4, scoped, tag = 'scoped memory for tpu_custom_call.1']
    #allocation5 [shape = 'u8[65536]{0}', space=vmem, size = 0x10000, scoped, tag = 'input window, operand 1, single buffered']
    #allocation6 [shape = 's32[1]{0}', space=sflag, size = 0x4, scoped, tag = 'scoped memory for tpu_custom_call.1']
    #allocation7 [shape = 'u8[8192]{0}', space=vmem, size = 0x2000, scoped, tag = 'input window, operand 2, single buffered']
    #allocation8 [shape = 'u8[8192]{0}', space=vmem, size = 0x2000, scoped, tag = 'input window, operand 3, single buffered']
    #allocation9 [shape = 's32[1]{0}', space=sflag, size = 0x4, scoped, tag = 'scoped memory for tpu_custom_call.1']
    #allocation10 [shape = 'u8[8192]{0}', space=vmem, size = 0x2000, scoped, tag = 'output window, operand 0, single buffered']
    %9 = vsyncpa [#allocation3], 0
    %10 = vsyncpa [#allocation6], 0
    %11 = vsyncpa [#allocation9], 0
    %12 = vsyncpa [#allocation4], 0
    // Predicated region
    $region2: #{tpu_custom_call.1} parent=1 // pred_check
      _
    $region3: #{tpu_custom_call.1} parent=1 // pred_check_branch
      %14 = sbr.rel (0) target = $region5
    $region4: #{tpu_custom_call.1} parent=1 // pred_region
      %s16 = ssub.s32 256, 256
      %17 = vsyncadd [#allocation3], %s16
      %s18 = sshll.u32 [#allocation2], 4
      %s19 = int_to_ptr.vmem [resolvable:$true] %s18
      %24 = dma.hbm_to_vmem [thread:$0]  %s0, 256, %s19, [#allocation3], 128, 128, 8
    $region5: #{tpu_custom_call.1} parent=1 // pred_fallthru
      _
    // Predicated region
    $region6: #{tpu_custom_call.1} parent=1 // pred_check
      _
    $region7: #{tpu_custom_call.1} parent=1 // pred_check_branch
      %26 = sbr.rel (0) target = $region9
    $region8: #{tpu_custom_call.1} parent=1 // pred_region
      %s28 = ssub.s32 2048, 2048
      %29 = vsyncadd [#allocation6], %s28
      %s30 = sshll.u32 [#allocation5], 4
      %s31 = int_to_ptr.vmem [resolvable:$true] %s30
      %36 = dma.hbm_to_vmem [thread:$0]  %s1, 2048, %s31, [#allocation6], 128, 128, 8
    $region9: #{tpu_custom_call.1} parent=1 // pred_fallthru
      _
    // Predicated region
    $region10: #{tpu_custom_call.1} parent=1 // pred_check
      _
    $region11: #{tpu_custom_call.1} parent=1 // pred_check_branch
      %38 = sbr.rel (0) target = $region13
    $region12: #{tpu_custom_call.1} parent=1 // pred_region
      %s40 = ssub.s32 256, 256
      %41 = vsyncadd [#allocation6], %s40
      %s42 = sshll.u32 [#allocation7], 4
      %s43 = int_to_ptr.vmem [resolvable:$true] %s42
      %48 = dma.hbm_to_vmem [thread:$0]  %s2, 256, %s43, [#allocation6], 128, 128, 8
    $region13: #{tpu_custom_call.1} parent=1 // pred_fallthru
      _
    // Predicated region
    $region14: #{tpu_custom_call.1} parent=1 // pred_check
      _
    $region15: #{tpu_custom_call.1} parent=1 // pred_check_branch
      %50 = sbr.rel (0) target = $region17
    $region16: #{tpu_custom_call.1} parent=1 // pred_region
      %s52 = ssub.s32 256, 256
      %53 = vsyncadd [#allocation9], %s52
      %s54 = sshll.u32 [#allocation8], 4
      %s55 = int_to_ptr.vmem [resolvable:$true] %s54
      %60 = dma.hbm_to_vmem [thread:$0]  %s3, 256, %s55, [#allocation9], 128, 128, 8
    $region17: #{tpu_custom_call.1} parent=1 // pred_fallthru
      _
    // Predicated region
    $region18: #{tpu_custom_call.1} parent=1 // pred_check
      _
    $region19: #{tpu_custom_call.1} parent=1 // pred_check_branch
      %62 = sbr.rel (0) target = $region21
    $region20: #{tpu_custom_call.1} parent=1 // pred_region
      %63 = dma.done [#allocation3], 256
    $region21: #{tpu_custom_call.1} parent=1 // pred_fallthru
      _
    // Predicated region
    $region22: #{tpu_custom_call.1} parent=1 // pred_check
      _
    $region23: #{tpu_custom_call.1} parent=1 // pred_check_branch
      %65 = sbr.rel (0) target = $region25
    $region24: #{tpu_custom_call.1} parent=1 // pred_region
      %66 = dma.done [#allocation6], 2048
    $region25: #{tpu_custom_call.1} parent=1 // pred_fallthru
      _
    // Predicated region
    $region26: #{tpu_custom_call.1} parent=1 // pred_check
      _
    $region27: #{tpu_custom_call.1} parent=1 // pred_check_branch
      %68 = sbr.rel (0) target = $region29
    $region28: #{tpu_custom_call.1} parent=1 // pred_region
      %69 = dma.done [#allocation6], 256
    $region29: #{tpu_custom_call.1} parent=1 // pred_fallthru
      _
    // Predicated region
    $region30: #{tpu_custom_call.1} parent=1 // pred_check
      _
    $region31: #{tpu_custom_call.1} parent=1 // pred_check_branch
      %71 = sbr.rel (0) target = $region33
    $region32: #{tpu_custom_call.1} parent=1 // pred_region
      %72 = dma.done [#allocation9], 256
    $region33: #{tpu_custom_call.1} parent=1 // pred_fallthru
      _
    %v73 = vld [vmem:[#allocation7] sm:$0xff]
    %v74 = vld [vmem:[#allocation7 + $0x8] sm:$0xff]
    %v75 = vld [vmem:[#allocation2] sm:$0xff]
    %v76 = vld [vmem:[#allocation2 + $0x8] sm:$0xff]
    %v77 = vld [vmem:[#allocation5] sm:$0xff]
    %v78 = vld [vmem:[#allocation5 + $0x8] sm:$0xff]
    %v79 = vld [vmem:[#allocation5 + $0x10] sm:$0xff]
    %v80 = vld [vmem:[#allocation5 + $0x18] sm:$0xff]
    %v81 = vld [vmem:[#allocation5 + $0x20] sm:$0xff]
    %v82 = vld [vmem:[#allocation5 + $0x28] sm:$0xff]
    %v83 = vld [vmem:[#allocation5 + $0x30] sm:$0xff]
    %v84 = vld [vmem:[#allocation5 + $0x38] sm:$0xff]
    %v85 = vld [vmem:[#allocation5 + $0x40] sm:$0xff]
    %v86 = vld [vmem:[#allocation5 + $0x48] sm:$0xff]
    %v87 = vld [vmem:[#allocation5 + $0x50] sm:$0xff]
    %v88 = vld [vmem:[#allocation5 + $0x58] sm:$0xff]
    %v89 = vld [vmem:[#allocation5 + $0x60] sm:$0xff]
    %v90 = vld [vmem:[#allocation5 + $0x68] sm:$0xff]
    %v91 = vld [vmem:[#allocation5 + $0x70] sm:$0xff]
    %v92 = vld [vmem:[#allocation5 + $0x78] sm:$0xff]
    %93 = vmatprep.subr.mxu0 0.0
    %94 = vmatpush1.msra.mxu0 %v77
    %95 = vmatprep.subr.mxu0 0.0
    %96 = vmatpush1.msra.mxu0 %v78
    %97 = vmatprep.subr.mxu0 0.0
    %98 = vmatpush1.msra.mxu0 %v79
    %99 = vmatprep.subr.mxu0 0.0
    %100 = vmatpush1.msra.mxu0 %v80
    %101 = vmatprep.subr.mxu0 0.0
    %102 = vmatpush1.msra.mxu0 %v81
    %103 = vmatprep.subr.mxu0 0.0
    %104 = vmatpush1.msra.mxu0 %v82
    %105 = vmatprep.subr.mxu0 0.0
    %106 = vmatpush1.msra.mxu0 %v83
    %107 = vmatprep.subr.mxu0 0.0
    %108 = vmatpush1.msra.mxu0 %v84
    %109 = vmatprep.subr.mxu0 0.0
    %110 = vmatpush1.msra.mxu0 %v85
    %111 = vmatprep.subr.mxu0 0.0
    %112 = vmatpush1.msra.mxu0 %v86
    %113 = vmatprep.subr.mxu0 0.0
    %114 = vmatpush1.msra.mxu0 %v87
    %115 = vmatprep.subr.mxu0 0.0
    %116 = vmatpush1.msra.mxu0 %v88
    %117 = vmatprep.subr.mxu0 0.0
    %118 = vmatpush1.msra.mxu0 %v89
    %119 = vmatprep.subr.mxu0 0.0
    %120 = vmatpush1.msra.mxu0 %v90
    %121 = vmatprep.subr.mxu0 0.0
    %122 = vmatpush1.msra.mxu0 %v91
    %123 = vmatprep.subr.mxu0 0.0
    %124 = vmatpush1.msra.mxu0 %v92
    %125 = vmatprep.subr.mxu0 0.0
    %126 = vmatpush1.msra.mxu0 0.0
    %127 = vmatprep.subr.mxu0 0.0
    %128 = vmatpush1.msra.mxu0 0.0
    %129 = vmatprep.subr.mxu0 0.0
    %130 = vmatpush1.msra.mxu0 0.0
    %131 = vmatprep.subr.mxu0 0.0
    %132 = vmatpush1.msra.mxu0 0.0
    %133 = vmatprep.subr.mxu0 0.0
    %134 = vmatpush1.msra.mxu0 0.0
    %135 = vmatprep.subr.mxu0 0.0
    %136 = vmatpush1.msra.mxu0 0.0
    %137 = vmatprep.subr.mxu0 0.0
    %138 = vmatpush1.msra.mxu0 0.0
    %139 = vmatprep.subr.mxu0 0.0
    %140 = vmatpush1.msra.mxu0 0.0
    %141 = vmatprep.subr.mxu0 0.0
    %142 = vmatpush1.msra.mxu0 0.0
    %143 = vmatprep.subr.mxu0 0.0
    %144 = vmatpush1.msra.mxu0 0.0
    %145 = vmatprep.subr.mxu0 0.0
    %146 = vmatpush1.msra.mxu0 0.0
    %147 = vmatprep.subr.mxu0 0.0
    %148 = vmatpush1.msra.mxu0 0.0
    %149 = vmatprep.subr.mxu0 0.0
    %150 = vmatpush1.msra.mxu0 0.0
    %151 = vmatprep.subr.mxu0 0.0
    %152 = vmatpush1.msra.mxu0 0.0
    %153 = vmatprep.subr.mxu0 0.0
    %154 = vmatpush1.msra.mxu0 0.0
    %155 = vmatprep.subr.mxu0 0.0
    %156 = vmatpush1.msra.mxu0 0.0
    %157 = vmatprep.mubr.f32.mxu0 0.0
    %158 = vmatmul.mubr.f32.gmra.mrb[0].mxu0 %v73
    %v159 = vpop.f32.mrb[0].mxu0
    %v160 = vadd.f32 0.0, %v159
    %v161 = vpop.f32.mrb[0].mxu0
    %162 = vmatprep.mubr.f32.mxu0 0.0
    %163 = vmatmul.mubr.f32.gmra.mrb[0].mxu0 %v74
    %v164 = vpop.f32.mrb[0].mxu0
    %v165 = vadd.f32 0.0, %v164
    %v166 = vpop.f32.mrb[0].mxu0
    %167 = vdwg.mxu0
    %vm168 = vcmask 130048
    %v170 = vsel %vm168, %v75, 0
    %v173 = vsel %vm168, %v76, 0
    %175 = vmatprep.subr.mxu0 0.0
    %176 = vmatpush1.msra.mxu0 %v73
    %177 = vmatprep.subr.mxu0 0.0
    %178 = vmatpush1.msra.mxu0 %v74
    %179 = vmatprep.subr.mxu0 0.0
    %180 = vmatpush1.msra.mxu0 0.0
    %181 = vmatprep.subr.mxu0 0.0
    %182 = vmatpush1.msra.mxu0 0.0
    %183 = vmatprep.subr.mxu0 0.0
    %184 = vmatpush1.msra.mxu0 0.0
    %185 = vmatprep.subr.mxu0 0.0
    %186 = vmatpush1.msra.mxu0 0.0
    %187 = vmatprep.subr.mxu0 0.0
    %188 = vmatpush1.msra.mxu0 0.0
    %189 = vmatprep.subr.mxu0 0.0
    %190 = vmatpush1.msra.mxu0 0.0
    %191 = vmatprep.subr.mxu0 0.0
    %192 = vmatpush1.msra.mxu0 0.0
    %193 = vmatprep.subr.mxu0 0.0
    %194 = vmatpush1.msra.mxu0 0.0
    %195 = vmatprep.subr.mxu0 0.0
    %196 = vmatpush1.msra.mxu0 0.0
    %197 = vmatprep.subr.mxu0 0.0
    %198 = vmatpush1.msra.mxu0 0.0
    %199 = vmatprep.subr.mxu0 0.0
    %200 = vmatpush1.msra.mxu0 0.0
    %201 = vmatprep.subr.mxu0 0.0
    %202 = vmatpush1.msra.mxu0 0.0
    %203 = vmatprep.subr.mxu0 0.0
    %204 = vmatpush1.msra.mxu0 0.0
    %205 = vmatprep.subr.mxu0 0.0
    %206 = vmatpush1.msra.mxu0 0.0
    %207 = vmatprep.subr.mxu0 0.0
    %208 = vmatpush1.msra.mxu0 0.0
    %209 = vmatprep.subr.mxu0 0.0
    %210 = vmatpush1.msra.mxu0 0.0
    %211 = vmatprep.subr.mxu0 0.0
    %212 = vmatpush1.msra.mxu0 0.0
    %213 = vmatprep.subr.mxu0 0.0
    %214 = vmatpush1.msra.mxu0 0.0
    %215 = vmatprep.subr.mxu0 0.0
    %216 = vmatpush1.msra.mxu0 0.0
    %217 = vmatprep.subr.mxu0 0.0
    %218 = vmatpush1.msra.mxu0 0.0
    %219 = vmatprep.subr.mxu0 0.0
    %220 = vmatpush1.msra.mxu0 0.0
    %221 = vmatprep.subr.mxu0 0.0
    %222 = vmatpush1.msra.mxu0 0.0
    %223 = vmatprep.subr.mxu0 0.0
    %224 = vmatpush1.msra.mxu0 0.0
    %225 = vmatprep.subr.mxu0 0.0
    %226 = vmatpush1.msra.mxu0 0.0
    %227 = vmatprep.subr.mxu0 0.0
    %228 = vmatpush1.msra.mxu0 0.0
    %229 = vmatprep.subr.mxu0 0.0
    %230 = vmatpush1.msra.mxu0 0.0
    %231 = vmatprep.subr.mxu0 0.0
    %232 = vmatpush1.msra.mxu0 0.0
    %233 = vmatprep.subr.mxu0 0.0
    %234 = vmatpush1.msra.mxu0 0.0
    %235 = vmatprep.subr.mxu0 0.0
    %236 = vmatpush1.msra.mxu0 0.0
    %237 = vmatprep.subr.mxu0 0.0
    %238 = vmatpush1.msra.mxu0 0.0
    %239 = vmatprep.mubr.f32.mxu0 0.0
    %240 = vmatmul.mubr.f32.gmra.mrb[0].mxu0 %v170
    %v241 = vpop.f32.mrb[0].mxu0
    %v242 = vadd.f32 %v160, %v241
    %v243 = vpop.f32.mrb[0].mxu0
    %244 = vmatprep.mubr.f32.mxu0 0.0
    %245 = vmatmul.mubr.f32.gmra.mrb[0].mxu0 %v173
    %v246 = vpop.f32.mrb[0].mxu0
    %v247 = vadd.f32 %v165, %v246
    %v248 = vpop.f32.mrb[0].mxu0
    %249 = vdwg.mxu0
    %v250 = vld [vmem:[#allocation8] sm:$0xff]
    %v251 = vld [vmem:[#allocation8 + $0x8] sm:$0xff]
    %v252 = vadd.f32 %v242, %v250
    %v253 = vadd.f32 %v247, %v251
    %254 = vst [vmem:[#allocation10] sm:$0xff] %v252
    %255 = vst [vmem:[#allocation10 + $0x8] sm:$0xff] %v253
    // Predicated region
    $region34: #{tpu_custom_call.1} parent=1 // pred_check
      _
    $region35: #{tpu_custom_call.1} parent=1 // pred_check_branch
      %257 = sbr.rel (0) target = $region37
    $region36: #{tpu_custom_call.1} parent=1 // pred_region
      %s259 = ssub.s32 256, 256
      %260 = vsyncadd [#allocation4], %s259
      %s261 = sshll.u32 [#allocation10], 4
      %s262 = int_to_ptr.vmem [resolvable:$true] %s261
      %267 = dma.vmem_to_hbm [thread:$0]  %s262, 256, %s4, [#allocation4], 128, 128, 8
    $region37: #{tpu_custom_call.1} parent=1 // pred_fallthru
      _
    // Predicated region
    $region38: #{tpu_custom_call.1} parent=1 // pred_check
      _
    $region39: #{tpu_custom_call.1} parent=1 // pred_check_branch
      %269 = sbr.rel (0) target = $region41
    $region40: #{tpu_custom_call.1} parent=1 // pred_region
      %270 = dma.done [#allocation4], 256
    $region41: #{tpu_custom_call.1} parent=1 // pred_fallthru
      _
    %271 = vsyncpa [#allocation3], 1
    %272 = vsyncpa [#allocation6], 1
    %273 = vsyncpa [#allocation9], 1
    %274 = vsyncpa [#allocation4], 1

</llo_original>
